<compile_context>
chip_gen: v5e
topology: v5e:2x2
jax: 0.10.0
libtpu: 0.0.40
codegen_flags: <defaults>
</compile_context>

<pallas_src>
import functools

import jax
import jax.numpy as jnp
from jax.experimental import pallas as pl
from jax.experimental.pallas import tpu as pltpu


def _patch_embed_kernel(x_ref, w_ref, b_ref, o_ref):
    # x_ref: (TM, K) bf16 patch tile
    # w_ref: (K, E)  bf16 projection weight (resident across the grid)
    # b_ref: (1, E)  f32 bias (resident across the grid)
    # o_ref: (TM, E) projected patch tile
    acc = jnp.dot(x_ref[...], w_ref[...], preferred_element_type=jnp.float32)
    o_ref[...] = (acc + b_ref[...]).astype(o_ref.dtype)


@functools.partial(
    jax.jit, static_argnames=("patch_size", "tile_m", "compute_dtype"))
def patch_embed_forward(x, weight, bias, patch_size, *, tile_m=512,
                        compute_dtype=jnp.bfloat16):
    """x: (B, C, H, W). weight: (E, C, P, P). bias: (E,).

    Returns (B, E, H//P, W//P), matching nn.Conv2d(stride=P, kernel=P).
    """
    B, C, H, W = x.shape
    P = patch_size
    E = weight.shape[0]
    assert H % P == 0 and W % P == 0
    Hp, Wp = H // P, W // P
    N = B * Hp * Wp
    K = C * P * P

    # --- glue: extract non-overlapping patches, flatten in (C, P, P) order to
    # match the Conv2d weight layout (E, C, kh, kw).  The bf16 cast fuses into
    # this transpose under jit (no extra HBM pass).
    xp = x.reshape(B, C, Hp, P, Wp, P)
    xp = jnp.transpose(xp, (0, 2, 4, 1, 3, 5)).reshape(N, K)
    xp = xp.astype(compute_dtype)

    w2d = weight.reshape(E, K).T.astype(compute_dtype)   # (K, E)
    b2d = bias.astype(jnp.float32).reshape(1, E)          # (1, E)

    # M tile: MXU-aligned (multiple of 256) when N is large enough, otherwise
    # the full N (full-dim blocks always satisfy the (8,128) tiling rule).
    tm = tile_m if N >= tile_m else N
    grid = (pl.cdiv(N, tm),)

    out = pl.pallas_call(
        _patch_embed_kernel,
        out_shape=jax.ShapeDtypeStruct((N, E), x.dtype),
        grid=grid,
        in_specs=[
            pl.BlockSpec((tm, K), lambda i: (i, 0)),   # streamed patch tiles
            pl.BlockSpec((K, E), lambda i: (0, 0)),    # weight: resident
            pl.BlockSpec((1, E), lambda i: (0, 0)),    # bias:   resident
        ],
        out_specs=pl.BlockSpec((tm, E), lambda i: (i, 0)),
        compiler_params=pltpu.CompilerParams(
            # N-tiles are independent -> shard across v7x's 2 TensorCores.
            dimension_semantics=("parallel",)),
    )(xp, w2d, b2d)

    # --- glue: back to NCHW conv-output layout (B, E, Hp, Wp).
    out = out.reshape(B, Hp, Wp, E)
    out = jnp.transpose(out, (0, 3, 1, 2))
    return out


if __name__ == "__main__":
    # Small demo shapes consistent with the module:
    #   img_size=16, patch_size=4, in_chans=4, embed_dim=32, batch=2
    # (production SETR shapes: img 768, P=16, C=3, E=1024 -> N=4608, K=768.)
    B, C, H, W = 2, 4, 16, 16
    P = 4
    E = 32

    key = jax.random.PRNGKey(0)
    kx, kw, kb = jax.random.split(key, 3)
    x = jax.random.normal(kx, (B, C, H, W), dtype=jnp.float32)
    # Deterministic synthetic Conv2d parameters (shape matches nn.Conv2d(C, E, P, P)).
    weight = jax.random.normal(kw, (E, C, P, P), dtype=jnp.float32) * 0.02
    bias = jax.random.normal(kb, (E,), dtype=jnp.float32) * 0.02

    out = patch_embed_forward(x, weight, bias, P)
    out = jax.block_until_ready(out)
    assert out.shape == (B, E, H // P, W // P), out.shape

    # Reference: XLA conv in f32 (same semantics as nn.Conv2d stride=P).
    # The kernel uses the bf16 MXU path with f32 accumulation, so compare at
    # mixed-precision tolerance.
    ref = jax.lax.conv_general_dilated(
        x, weight, window_strides=(P, P), padding="VALID",
        dimension_numbers=("NCHW", "OIHW", "NCHW"),
    ) + bias.reshape(1, E, 1, 1)
    max_err = float(jnp.max(jnp.abs(out - ref)))
    assert jnp.allclose(out, ref, atol=2e-2, rtol=2e-2), max_err

    print("KERNEL_OK")
</pallas_src>

<mosaic_0001>
module attributes {stable_mosaic.version = 11 : i64} {
  func.func @_patch_embed_kernel(%arg0: i32, %arg1: memref<32x64xbf16, #tpu.memory_space<vmem>>, %arg2: memref<64x32xbf16, #tpu.memory_space<vmem>>, %arg3: memref<1x32xf32, #tpu.memory_space<vmem>>, %arg4: memref<32x32xf32, #tpu.memory_space<vmem>>) attributes {dimension_semantics = [#tpu.dimension_semantics<parallel>], iteration_bounds = array<i64: 1>, scalar_prefetch = 0 : i64, scratch_operands = 0 : i64, tpu.core_type = #tpu.core_type<tc>, window_params = [{transform_indices = @transform_0, window_bounds = array<i64: 32, 64>}, {pipeline_mode = #tpu.pipeline_mode<synchronous>, transform_indices = @transform_1, window_bounds = array<i64: 64, 32>}, {pipeline_mode = #tpu.pipeline_mode<synchronous>, transform_indices = @transform_2, window_bounds = array<i64: 1, 32>}, {transform_indices = @transform_3, window_bounds = array<i64: 32, 32>}]} {
    %c0 = arith.constant 0 : index
    %c0_0 = arith.constant 0 : index
    %0 = vector.load %arg1[%c0, %c0_0] : memref<32x64xbf16, #tpu.memory_space<vmem>>, vector<32x64xbf16>
    %c0_1 = arith.constant 0 : index
    %c0_2 = arith.constant 0 : index
    %1 = vector.load %arg2[%c0_1, %c0_2] : memref<64x32xbf16, #tpu.memory_space<vmem>>, vector<64x32xbf16>
    %cst = arith.constant dense<0.000000e+00> : vector<32x32xf32>
    %2 = tpu.matmul %0, %1, %cst {dimension_numbers = #tpu.dot_dimension_numbers<[1], [0], [0], [1], [0, 0, 1, 1], [], []>} : vector<32x64xbf16>, vector<64x32xbf16>, vector<32x32xf32> -> vector<32x32xf32>
    %c0_3 = arith.constant 0 : index
    %c0_4 = arith.constant 0 : index
    %3 = vector.load %arg3[%c0_3, %c0_4] : memref<1x32xf32, #tpu.memory_space<vmem>>, vector<1x32xf32>
    %4 = vector.broadcast %3 : vector<1x32xf32> to vector<32x32xf32>
    %5 = arith.addf %2, %4 : vector<32x32xf32>
    %c0_5 = arith.constant 0 : index
    %c0_6 = arith.constant 0 : index
    %6 = vector.load %arg4[%c0_5, %c0_6] : memref<32x32xf32, #tpu.memory_space<vmem>>, vector<32x32xf32>
    tpu.vector_store %arg4[%c0_5, %c0_6], %5 {strides = array<i32>} : memref<32x32xf32, #tpu.memory_space<vmem>>, vector<32x32xf32>,
    return
  }
  func.func @transform_0(%arg0: i32) -> (i32, i32) {
    %c0_i32 = arith.constant 0 : i32
    %c0_i32_0 = arith.constant 0 : i32
    return %arg0, %c0_i32 : i32, i32
  }
  func.func @transform_1(%arg0: i32) -> (i32, i32) {
    %c0_i32 = arith.constant 0 : i32
    %c0_i32_0 = arith.constant 0 : i32
    %c0_i32_1 = arith.constant 0 : i32
    return %c0_i32, %c0_i32_0 : i32, i32
  }
  func.func @transform_2(%arg0: i32) -> (i32, i32) {
    %c0_i32 = arith.constant 0 : i32
    %c0_i32_0 = arith.constant 0 : i32
    %c0_i32_1 = arith.constant 0 : i32
    return %c0_i32, %c0_i32_0 : i32, i32
  }
  func.func @transform_3(%arg0: i32) -> (i32, i32) {
    %c0_i32 = arith.constant 0 : i32
    %c0_i32_0 = arith.constant 0 : i32
    return %arg0, %c0_i32 : i32, i32
  }
}

</mosaic_0001>

<llo_original>
// kernel: patch_embed_forward.1
$region0: #{patch_embed_forward.1}
  #allocation0 [shape = 'u32[]', space=smem, size = 0x4, offset = 0x4, fixed_abs, tag = 'smem constant byte address 0x4 - core index']
  #allocation1 [shape = 'u32[72,128]{1,0:T(1,128)}', space=vmem, size = 0x9000, scoped, tag = 'internal scratch']
  %s0 = inlined_call_operand.vmem [shape: bf16[32,64], index: 0, kind: input, shape index: {}]
  %s1 = inlined_call_operand.vmem [shape: bf16[64,32], index: 1, kind: input, shape index: {}]
  %s2 = inlined_call_operand.vmem [shape: f32[1,32], index: 2, kind: input, shape index: {}]
  %s3 = inlined_call_operand.hbm [shape: f32[32,32], index: 3, kind: output, shape index: {}]
  %s4 = sld [smem:[#allocation0]]
  $region22: #{patch_embed_forward.1} parent=0
    _
  %s6 = ssub.s32 1, %s4
  %s7 = scalar_select 0, %s6, %s4
  $region1: #{patch_embed_forward.1} parent=0
    #allocation2 [shape = 'u8[16384]{0}', space=vmem, size = 0x4000, scoped, tag = 'output window, operand 0, single buffered']
    #allocation3 [shape = 's32[1]{0}', space=sflag, size = 0x4, scoped, tag = 'scoped memory for patch_embed_forward.1']
    %8 = vsyncpa [#allocation3], 0
    // Predicated region
    $region2: #{patch_embed_forward.1} parent=1 // pred_check
      _
    $region3: #{patch_embed_forward.1} parent=1 // pred_check_branch
      %10 = sbr.rel (0) target = $region5
    $region4: #{patch_embed_forward.1} parent=1 // pred_region
      _
    $region5: #{patch_embed_forward.1} parent=1 // pred_fallthru
      _
    // Predicated region
    $region6: #{patch_embed_forward.1} parent=1 // pred_check
      _
    $region7: #{patch_embed_forward.1} parent=1 // pred_check_branch
      %12 = sbr.rel (0) target = $region9
    $region8: #{patch_embed_forward.1} parent=1 // pred_region
      _
    $region9: #{patch_embed_forward.1} parent=1 // pred_fallthru
      _
    // Predicated region
    $region10: #{patch_embed_forward.1} parent=1 // pred_check
      _
    $region11: #{patch_embed_forward.1} parent=1 // pred_check_branch
      %14 = sbr.rel (0) target = $region13
    $region12: #{patch_embed_forward.1} parent=1 // pred_region
      _
    $region13: #{patch_embed_forward.1} parent=1 // pred_fallthru
      _
    %v16 = vld [vmem:[%s0] sm:$0xf]
    %v17 = vld [vmem:[%s0 + $0x4] sm:$0xf]
    %v18 = vld [vmem:[%s0 + $0x8] sm:$0xf]
    %v19 = vld [vmem:[%s0 + $0xc] sm:$0xf]
    %v20 = vld [vmem:[%s1] sm:$0xf]
    %v21 = vld [vmem:[%s1 + $0x4] sm:$0xf]
    %v22 = vld [vmem:[%s1 + $0x8] sm:$0xf]
    %v23 = vld [vmem:[%s1 + $0xc] sm:$0xf]
    %v24 = vld [vmem:[%s1 + $0x10] sm:$0xf]
    %v25 = vld [vmem:[%s1 + $0x14] sm:$0xf]
    %v26 = vld [vmem:[%s1 + $0x18] sm:$0xf]
    %v27 = vld [vmem:[%s1 + $0x1c] sm:$0xf]
    %v28 = vld [vmem:[%s2] sm:$0x1]
    %v30 = vperm.slane %v28, 0
    %v36 = vunpack.c.l.b16 %v16
    %v37 = vunpack.c.l.b16 %v17
    %v38 = vunpack.c.l.b16 %v18
    %v39 = vunpack.c.l.b16 %v19
    %v40 = vpack.c.b16 %v37, %v36
    %v41 = vpack.c.b16 %v39, %v38
    %v50 = vunpack.c.l.b16 %v20
    %v51 = vunpack.c.l.b16 %v21
    %v52 = vunpack.c.l.b16 %v22
    %v53 = vunpack.c.l.b16 %v23
    %v54 = vunpack.c.l.b16 %v24
    %v55 = vunpack.c.l.b16 %v25
    %v56 = vunpack.c.l.b16 %v26
    %v57 = vunpack.c.l.b16 %v27
    %v58 = vpack.c.b16 %v51, %v50
    %v59 = vpack.c.b16 %v53, %v52
    %v60 = vpack.c.b16 %v55, %v54
    %v61 = vpack.c.b16 %v57, %v56
    %vm66 = vcmask 523264
    %v68 = vsel %vm66, %v40, 0
    %v71 = vsel %vm66, %v41, 0
    %73 = vmatpush.bf16.msra.mxu0 0
    %74 = vmatpush.bf16.msra.mxu0 0
    %75 = vmatpush.bf16.msra.mxu0 0
    %76 = vmatpush.bf16.msra.mxu0 0
    %77 = vmatpush.bf16.msra.mxu0 %v61
    %78 = vmatpush.bf16.msra.mxu0 %v60
    %79 = vmatpush.bf16.msra.mxu0 %v59
    %80 = vmatpush.bf16.msra.mxu0 %v58
    %81 = vmatmul.bf16.gmra.mxu0 %v68
    %v82 = vpop.f32.mrf.mxu0
    %v83 = vadd.f32 %v30, %v82
    %v84 = vpop.f32.mrf.mxu0
    %v85 = vadd.f32 %v30, %v84
    %86 = vmatmul.bf16.gmra.mxu0 %v71
    %v87 = vpop.f32.mrf.mxu0
    %v88 = vadd.f32 %v30, %v87
    %v89 = vpop.f32.mrf.mxu0
    %v90 = vadd.f32 %v30, %v89
    %91 = vdwg.mxu0
    %vm92 = vcmask 261120
    %93 = vst.msk [vmem:[#allocation2] sm:$0xff] %vm92, %v83
    %94 = vst.msk [vmem:[#allocation2 + $0x8] sm:$0xff] %vm92, %v85
    %95 = vst.msk [vmem:[#allocation2 + $0x10] sm:$0xff] %vm92, %v88
    %96 = vst.msk [vmem:[#allocation2 + $0x18] sm:$0xff] %vm92, %v90
    // Predicated region
    $region14: #{patch_embed_forward.1} parent=1 // pred_check
      _
    $region15: #{patch_embed_forward.1} parent=1 // pred_check_branch
      %98 = sbr.rel (0) target = $region17
    $region16: #{patch_embed_forward.1} parent=1 // pred_region
      %100 = vsyncadd [#allocation3], 0
      %s101 = sshll.u32 [#allocation2], 4
      %s102 = int_to_ptr.vmem [resolvable:$true] %s101
      %s103 = sshll.u32 %s3, 4
      %s104 = int_to_ptr.hbm [resolvable:$true] %s103
      %109 = dma.vmem_to_hbm [thread:$0]  %s102, 512, %s104, [#allocation3], 128, 128, 8
    $region17: #{patch_embed_forward.1} parent=1 // pred_fallthru
      _
    // Predicated region
    $region18: #{patch_embed_forward.1} parent=1 // pred_check
      _
    $region19: #{patch_embed_forward.1} parent=1 // pred_check_branch
      %111 = sbr.rel (0) target = $region21
    $region20: #{patch_embed_forward.1} parent=1 // pred_region
      %113 = dma.done [#allocation3], 512
    $region21: #{patch_embed_forward.1} parent=1 // pred_fallthru
      _
    %114 = vsyncpa [#allocation3], 1

</llo_original>
